<compile_context>
chip_gen: v7x
topology: tpu7x:2x2x1
jax: 0.10.0
libtpu: 0.0.40
codegen_flags: <defaults>
</compile_context>

<pallas_src>
import functools

import jax
import jax.numpy as jnp
from jax.experimental import pallas as pl
from jax.experimental.pallas import tpu as pltpu


def _round_up(x, m):
    return ((x + m - 1) // m) * m


def _tpu_vmem_info():
    """Returns (usable VMEM clamp in bytes, is_v7x)."""
    kind = ""
    try:
        kind = jax.devices()[0].device_kind.lower().replace(" ", "")
    except Exception:
        pass
    is_v7x = ("v7" in kind) or ("tpu7" in kind)
    if is_v7x:
        # v7x: 64 MiB physical VMEM per TensorCore -> leave generous headroom.
        return 48 * 1024 * 1024, True
    # v5e / v6e: 128 MiB physical VMEM.
    return 96 * 1024 * 1024, False


# --------------------------------------------------------------------------- #
# Kernels
# --------------------------------------------------------------------------- #
def _linear_kernel_single_k(x_ref, w_ref, b_ref, o_ref):
    # x: (tm, K_pad), w: (K_pad, tn), b: (1, tn), o: (tm, tn)
    o_ref[...] = (
        jnp.dot(x_ref[...], w_ref[...], preferred_element_type=jnp.float32)
        + b_ref[...]
    ).astype(o_ref.dtype)


def _linear_kernel_multi_k(x_ref, w_ref, b_ref, o_ref):
    # x: (tm, tk), w: (tk, tn), b: (1, tn), o: (tm, tn) resident across K.
    k = pl.program_id(2)

    @pl.when(k == 0)
    def _():
        o_ref[...] = jnp.zeros_like(o_ref)

    o_ref[...] += jnp.dot(
        x_ref[...], w_ref[...], preferred_element_type=jnp.float32
    ).astype(o_ref.dtype)

    @pl.when(k == pl.num_programs(2) - 1)
    def _():
        o_ref[...] = o_ref[...] + b_ref[...]


# --------------------------------------------------------------------------- #
# Layer factory: one-time parameter pre-layout + tile selection
# --------------------------------------------------------------------------- #
def make_sparse_final_layer(weight, bias, *, tn_pref=512, tk_pref=1024, tm_pref=512):
    """Builds SparseFinalLayer.forward from PyTorch-layout parameters.

    weight: (num_classes, concept_dim)  -- PyTorch nn.Linear convention
    bias:   (num_classes,)
    Returns apply(concepts, force_pallas=False) -> (B, num_classes) float32.
    """
    N, C = weight.shape
    assert bias.shape == (N,)

    vmem_cap, is_v7x = _tpu_vmem_info()

    # ---- static tile selection for N / K (depends only on param shapes) ----
    n_aligned = _round_up(N, 128)
    k_aligned = _round_up(C, 128)
    tn = min(tn_pref, n_aligned)
    tk = min(tk_pref, k_aligned)

    # v7x has 2 TensorCores: make sure there are >=2 blocks on a parallel axis
    # (the batch usually fits one M block for a classifier head).
    if is_v7x and n_aligned // tn <= 1 and n_aligned >= 256:
        tn = _round_up(pl.cdiv(n_aligned, 2), 128)

    # Shrink tn/tk until double-buffered tiles fit comfortably in VMEM.
    itemsize = 4  # f32 params / activations

    def _tile_bytes(tn_, tk_, tm_):
        return 2 * (tm_ * tk_ + tk_ * tn_ + tm_ * tn_ + tn_) * itemsize

    while _tile_bytes(tn, tk, tm_pref) > int(0.75 * vmem_cap) and (tn > 128 or tk > 128):
        if tk >= tn and tk > 128:
            tk = max(128, tk // 2)
        else:
            tn = max(128, tn // 2)

    N_pad = _round_up(n_aligned, tn)
    K_pad = _round_up(k_aligned, tk)
    single_k = K_pad == tk  # whole reduction fits one tile -> drop K grid axis

    # ---- ONE-TIME parameter pre-layout: (C, N) weight, padded; padded bias ----
    w_cn = jnp.pad(
        weight.T.astype(jnp.float32), ((0, K_pad - C), (0, N_pad - N))
    )
    b2 = jnp.pad(bias.astype(jnp.float32), (0, N_pad - N)).reshape(1, N_pad)

    # Keep originals for the tiny-problem jnp fallback.
    weight_f32 = weight.astype(jnp.float32)
    bias_f32 = bias.astype(jnp.float32)

    @functools.partial(jax.jit, static_argnames=("force_pallas",))
    def apply(concepts, force_pallas=False):
        B, C_in = concepts.shape
        assert C_in == C

        # Tiny problems: a fused XLA dot+bias beats any standalone kernel.
        if (not force_pallas) and (2 * B * C * N < (1 << 18)):
            return (concepts.astype(jnp.float32) @ weight_f32.T + bias_f32)

        tm = min(tm_pref, _round_up(B, 8))
        M_pad = _round_up(B, tm)

        # Per-call padding touches ONLY the (small) activations.
        x = concepts.astype(jnp.float32)
        if (M_pad, K_pad) != (B, C):
            x = jnp.pad(x, ((0, M_pad - B), (0, K_pad - C)))

        tk_used = K_pad if single_k else tk
        tile_bytes = _tile_bytes(tn, tk_used, tm)
        vmem_limit = int(min(max(2 * tile_bytes, 16 * 1024 * 1024), vmem_cap))

        cost = pl.CostEstimate(
            flops=2 * B * C * N,
            transcendentals=0,
            bytes_accessed=(B * C + C * N + B * N + N) * itemsize,
        )

        if single_k:
            grid = (M_pad // tm, N_pad // tn)
            grid_spec = pltpu.PrefetchScalarGridSpec(
                num_scalar_prefetch=0,
                grid=grid,
                in_specs=[
                    pl.BlockSpec((tm, K_pad), lambda i, j: (i, 0)),   # activations
                    pl.BlockSpec((K_pad, tn), lambda i, j: (0, j)),   # weight (C, N)
                    pl.BlockSpec((1, tn), lambda i, j: (0, j)),       # bias
                ],
                out_specs=pl.BlockSpec((tm, tn), lambda i, j: (i, j)),
            )
            kernel = _linear_kernel_single_k
            semantics = ("parallel", "parallel")
        else:
            grid = (M_pad // tm, N_pad // tn, K_pad // tk)
            grid_spec = pltpu.PrefetchScalarGridSpec(
                num_scalar_prefetch=0,
                grid=grid,
                in_specs=[
                    pl.BlockSpec((tm, tk), lambda i, j, k: (i, k)),   # activations
                    pl.BlockSpec((tk, tn), lambda i, j, k: (k, j)),   # weight (C, N)
                    pl.BlockSpec((1, tn), lambda i, j, k: (0, j)),    # bias
                ],
                out_specs=pl.BlockSpec((tm, tn), lambda i, j, k: (i, j)),
            )
            kernel = _linear_kernel_multi_k
            semantics = ("parallel", "parallel", "arbitrary")

        out_padded = pl.pallas_call(
            kernel,
            out_shape=jax.ShapeDtypeStruct((M_pad, N_pad), jnp.float32),
            grid_spec=grid_spec,
            compiler_params=pltpu.CompilerParams(
                dimension_semantics=semantics,
                vmem_limit_bytes=vmem_limit,
            ),
            cost_estimate=cost,
        )(x, w_cn, b2)

        return out_padded[:B, :N]

    return apply


if __name__ == "__main__":
    # Shapes consistent with the module: batch=8, concept_dim=32, num_classes=16
    B, CONCEPT_DIM, NUM_CLASSES = 8, 32, 16

    key = jax.random.PRNGKey(0)
    k_x, k_w, k_b = jax.random.split(key, 3)

    concepts = jax.random.normal(k_x, (B, CONCEPT_DIM), dtype=jnp.float32)

    # Deterministic PyTorch-style init: uniform(-1/sqrt(fan_in), 1/sqrt(fan_in))
    bound = 1.0 / (CONCEPT_DIM ** 0.5)
    weight = jax.random.uniform(
        k_w, (NUM_CLASSES, CONCEPT_DIM), dtype=jnp.float32, minval=-bound, maxval=bound
    )
    bias = jax.random.uniform(
        k_b, (NUM_CLASSES,), dtype=jnp.float32, minval=-bound, maxval=bound
    )

    layer = make_sparse_final_layer(weight, bias)
    # force_pallas=True so the Pallas kernel (not the tiny-shape jnp fallback) runs.
    out = layer(concepts, force_pallas=True)
    out = jax.block_until_ready(out)

    # Reference check in plain JAX (same semantics as torch nn.Linear).
    ref = concepts @ weight.T + bias
    assert out.shape == (B, NUM_CLASSES)
    assert jnp.allclose(out, ref, atol=1e-5, rtol=1e-5)

    print("KERNEL_OK")
</pallas_src>

<mosaic_0001>
module attributes {stable_mosaic.version = 11 : i64} {
  func.func @_linear_kernel_single_k(%arg0: i32, %arg1: i32, %arg2: memref<8x128xf32, #tpu.memory_space<vmem>>, %arg3: memref<128x128xf32, #tpu.memory_space<vmem>>, %arg4: memref<1x128xf32, #tpu.memory_space<vmem>>, %arg5: memref<8x128xf32, #tpu.memory_space<vmem>>) attributes {dimension_semantics = [#tpu.dimension_semantics<parallel>, #tpu.dimension_semantics<parallel>], iteration_bounds = array<i64: 1, 1>, scalar_prefetch = 0 : i64, scratch_operands = 0 : i64, tpu.core_type = #tpu.core_type<tc>, window_params = [{transform_indices = @transform_0, window_bounds = array<i64: 8, 128>}, {transform_indices = @transform_1, window_bounds = array<i64: 128, 128>}, {transform_indices = @transform_2, window_bounds = array<i64: 1, 128>}, {transform_indices = @transform_3, window_bounds = array<i64: 8, 128>}]} {
    %c0 = arith.constant 0 : index
    %c0_0 = arith.constant 0 : index
    %0 = vector.load %arg2[%c0, %c0_0] : memref<8x128xf32, #tpu.memory_space<vmem>>, vector<8x128xf32>
    %c0_1 = arith.constant 0 : index
    %c0_2 = arith.constant 0 : index
    %1 = vector.load %arg3[%c0_1, %c0_2] : memref<128x128xf32, #tpu.memory_space<vmem>>, vector<128x128xf32>
    %cst = arith.constant dense<0.000000e+00> : vector<8x128xf32>
    %2 = tpu.matmul %0, %1, %cst {dimension_numbers = #tpu.dot_dimension_numbers<[1], [0], [0], [1], [0, 0, 1, 1], [], []>} : vector<8x128xf32>, vector<128x128xf32>, vector<8x128xf32> -> vector<8x128xf32>
    %c0_3 = arith.constant 0 : index
    %c0_4 = arith.constant 0 : index
    %3 = vector.load %arg4[%c0_3, %c0_4] : memref<1x128xf32, #tpu.memory_space<vmem>>, vector<1x128xf32>
    %4 = vector.broadcast %3 : vector<1x128xf32> to vector<8x128xf32>
    %5 = arith.addf %2, %4 : vector<8x128xf32>
    %c0_5 = arith.constant 0 : index
    %c0_6 = arith.constant 0 : index
    %6 = vector.load %arg5[%c0_5, %c0_6] : memref<8x128xf32, #tpu.memory_space<vmem>>, vector<8x128xf32>
    tpu.vector_store %arg5[%c0_5, %c0_6], %5 {strides = array<i32>} : memref<8x128xf32, #tpu.memory_space<vmem>>, vector<8x128xf32>,
    return
  }
  func.func @transform_0(%arg0: i32, %arg1: i32) -> (i32, i32) {
    %c0_i32 = arith.constant 0 : i32
    %c0_i32_0 = arith.constant 0 : i32
    return %arg0, %c0_i32 : i32, i32
  }
  func.func @transform_1(%arg0: i32, %arg1: i32) -> (i32, i32) {
    %c0_i32 = arith.constant 0 : i32
    %c0_i32_0 = arith.constant 0 : i32
    return %c0_i32, %arg1 : i32, i32
  }
  func.func @transform_2(%arg0: i32, %arg1: i32) -> (i32, i32) {
    %c0_i32 = arith.constant 0 : i32
    %c0_i32_0 = arith.constant 0 : i32
    return %c0_i32, %arg1 : i32, i32
  }
  func.func @transform_3(%arg0: i32, %arg1: i32) -> (i32, i32) {
    %c0_i32 = arith.constant 0 : i32
    return %arg0, %arg1 : i32, i32
  }
}

</mosaic_0001>

<llo_original>
// kernel: apply.1
$region0: #{apply.1}
  #allocation0 [shape = 'u32[]', space=smem, size = 0x4, offset = 0x4, fixed_abs, tag = 'smem constant byte address 0x4 - core index']
  #allocation1 [shape = 'u32[144,128]{1,0:T(1,128)}', space=vmem, size = 0x12000, scoped, tag = 'internal scratch']
  %s0 = inlined_call_operand.vmem [shape: f32[8,128], index: 0, kind: input, shape index: {}]
  %s1 = inlined_call_operand.hbm [shape: f32[128,128], index: 1, kind: input, shape index: {}]
  %s2 = inlined_call_operand.vmem [shape: f32[1,128], index: 2, kind: input, shape index: {}]
  %s3 = inlined_call_operand.hbm [shape: f32[8,128], index: 3, kind: output, shape index: {}]
  %s4 = sld [smem:[#allocation0]]
  $region26: #{apply.1} parent=0
    _
  %s6 = ssub.s32 1, %s4
  %s7 = scalar_select 0, %s6, %s4
  $region1: #{apply.1} parent=0
    #allocation2 [shape = 'u8[65536]{0}', space=vmem, size = 0x10000, scoped, tag = 'input window, operand 1, single buffered']
    #allocation3 [shape = 's32[1]{0}', space=sflag, size = 0x4, scoped, tag = 'scoped memory for apply.1']
    #allocation4 [shape = 's32[1]{0}', space=sflag, size = 0x4, scoped, tag = 'scoped memory for apply.1']
    #allocation5 [shape = 'u8[4096]{0}', space=vmem, size = 0x1000, scoped, tag = 'output window, operand 0, single buffered']
    %8 = vsyncpa [#allocation3], 0
    %9 = vsyncpa [#allocation4], 0
    // Predicated region
    $region2: #{apply.1} parent=1 // pred_check
      _
    $region3: #{apply.1} parent=1 // pred_check_branch
      %11 = sbr.rel (0) target = $region5
    $region4: #{apply.1} parent=1 // pred_region
      _
    $region5: #{apply.1} parent=1 // pred_fallthru
      _
    // Predicated region
    $region6: #{apply.1} parent=1 // pred_check
      _
    $region7: #{apply.1} parent=1 // pred_check_branch
      %13 = sbr.rel (0) target = $region9
    $region8: #{apply.1} parent=1 // pred_region
      %s15 = ssub.s32 2048, 2048
      %16 = vsyncadd [#allocation3], %s15
      %s17 = sshll.u32 [#allocation2], 4
      %s18 = int_to_ptr.vmem [resolvable:$true] %s17
      %23 = dma.hbm_to_vmem [thread:$0]  %s1, 2048, %s18, [#allocation3], 128, 128, 8
    $region9: #{apply.1} parent=1 // pred_fallthru
      _
    // Predicated region
    $region10: #{apply.1} parent=1 // pred_check
      _
    $region11: #{apply.1} parent=1 // pred_check_branch
      %25 = sbr.rel (0) target = $region13
    $region12: #{apply.1} parent=1 // pred_region
      _
    $region13: #{apply.1} parent=1 // pred_fallthru
      _
    // Predicated region
    $region14: #{apply.1} parent=1 // pred_check
      _
    $region15: #{apply.1} parent=1 // pred_check_branch
      %27 = sbr.rel (0) target = $region17
    $region16: #{apply.1} parent=1 // pred_region
      %28 = dma.done [#allocation3], 2048
    $region17: #{apply.1} parent=1 // pred_fallthru
      _
    %v29 = vld [vmem:[%s0] sm:$0xff]
    %v30 = vld [vmem:[#allocation2] sm:$0xff]
    %v31 = vld [vmem:[#allocation2 + $0x8] sm:$0xff]
    %v32 = vld [vmem:[#allocation2 + $0x10] sm:$0xff]
    %v33 = vld [vmem:[#allocation2 + $0x18] sm:$0xff]
    %v34 = vld [vmem:[#allocation2 + $0x20] sm:$0xff]
    %v35 = vld [vmem:[#allocation2 + $0x28] sm:$0xff]
    %v36 = vld [vmem:[#allocation2 + $0x30] sm:$0xff]
    %v37 = vld [vmem:[#allocation2 + $0x38] sm:$0xff]
    %v38 = vld [vmem:[#allocation2 + $0x40] sm:$0xff]
    %v39 = vld [vmem:[#allocation2 + $0x48] sm:$0xff]
    %v40 = vld [vmem:[#allocation2 + $0x50] sm:$0xff]
    %v41 = vld [vmem:[#allocation2 + $0x58] sm:$0xff]
    %v42 = vld [vmem:[#allocation2 + $0x60] sm:$0xff]
    %v43 = vld [vmem:[#allocation2 + $0x68] sm:$0xff]
    %v44 = vld [vmem:[#allocation2 + $0x70] sm:$0xff]
    %v45 = vld [vmem:[#allocation2 + $0x78] sm:$0xff]
    %v46 = vld [vmem:[%s2] sm:$0x1]
    %v48 = vlaneseq
    %v49 = vshrl.u32 %v48, 7
    %v50 = vsub.s32 0, %v49
    %v51 = vrot.slane %v46, %v50
    %53 = vmatprep.subr.mxu0 0.0
    %54 = vmatpush1.msra.mxu0 %v30
    %55 = vmatprep.subr.mxu0 0.0
    %56 = vmatpush1.msra.mxu0 %v31
    %57 = vmatprep.subr.mxu0 0.0
    %58 = vmatpush1.msra.mxu0 %v32
    %59 = vmatprep.subr.mxu0 0.0
    %60 = vmatpush1.msra.mxu0 %v33
    %61 = vmatprep.subr.mxu0 0.0
    %62 = vmatpush1.msra.mxu0 %v34
    %63 = vmatprep.subr.mxu0 0.0
    %64 = vmatpush1.msra.mxu0 %v35
    %65 = vmatprep.subr.mxu0 0.0
    %66 = vmatpush1.msra.mxu0 %v36
    %67 = vmatprep.subr.mxu0 0.0
    %68 = vmatpush1.msra.mxu0 %v37
    %69 = vmatprep.subr.mxu0 0.0
    %70 = vmatpush1.msra.mxu0 %v38
    %71 = vmatprep.subr.mxu0 0.0
    %72 = vmatpush1.msra.mxu0 %v39
    %73 = vmatprep.subr.mxu0 0.0
    %74 = vmatpush1.msra.mxu0 %v40
    %75 = vmatprep.subr.mxu0 0.0
    %76 = vmatpush1.msra.mxu0 %v41
    %77 = vmatprep.subr.mxu0 0.0
    %78 = vmatpush1.msra.mxu0 %v42
    %79 = vmatprep.subr.mxu0 0.0
    %80 = vmatpush1.msra.mxu0 %v43
    %81 = vmatprep.subr.mxu0 0.0
    %82 = vmatpush1.msra.mxu0 %v44
    %83 = vmatprep.subr.mxu0 0.0
    %84 = vmatpush1.msra.mxu0 %v45
    %85 = vmatprep.subr.mxu0 0.0
    %86 = vmatpush1.msra.mxu0 0.0
    %87 = vmatprep.subr.mxu0 0.0
    %88 = vmatpush1.msra.mxu0 0.0
    %89 = vmatprep.subr.mxu0 0.0
    %90 = vmatpush1.msra.mxu0 0.0
    %91 = vmatprep.subr.mxu0 0.0
    %92 = vmatpush1.msra.mxu0 0.0
    %93 = vmatprep.subr.mxu0 0.0
    %94 = vmatpush1.msra.mxu0 0.0
    %95 = vmatprep.subr.mxu0 0.0
    %96 = vmatpush1.msra.mxu0 0.0
    %97 = vmatprep.subr.mxu0 0.0
    %98 = vmatpush1.msra.mxu0 0.0
    %99 = vmatprep.subr.mxu0 0.0
    %100 = vmatpush1.msra.mxu0 0.0
    %101 = vmatprep.subr.mxu0 0.0
    %102 = vmatpush1.msra.mxu0 0.0
    %103 = vmatprep.subr.mxu0 0.0
    %104 = vmatpush1.msra.mxu0 0.0
    %105 = vmatprep.subr.mxu0 0.0
    %106 = vmatpush1.msra.mxu0 0.0
    %107 = vmatprep.subr.mxu0 0.0
    %108 = vmatpush1.msra.mxu0 0.0
    %109 = vmatprep.subr.mxu0 0.0
    %110 = vmatpush1.msra.mxu0 0.0
    %111 = vmatprep.subr.mxu0 0.0
    %112 = vmatpush1.msra.mxu0 0.0
    %113 = vmatprep.subr.mxu0 0.0
    %114 = vmatpush1.msra.mxu0 0.0
    %115 = vmatprep.subr.mxu0 0.0
    %116 = vmatpush1.msra.mxu0 0.0
    %117 = vmatprep.mubr.f32.mxu0 0.0
    %118 = vmatmul.mubr.f32.gmra.mrb[0].mxu0 %v29
    %v119 = vpop.f32.mrb[0].mxu0
    %v120 = vadd.f32 %v51, %v119
    %v121 = vpop.f32.mrb[0].mxu0
    %122 = vdwg.mxu0
    %123 = vst [vmem:[#allocation5] sm:$0xff] %v120
    // Predicated region
    $region18: #{apply.1} parent=1 // pred_check
      _
    $region19: #{apply.1} parent=1 // pred_check_branch
      %125 = sbr.rel (0) target = $region21
    $region20: #{apply.1} parent=1 // pred_region
      %s127 = ssub.s32 128, 128
      %128 = vsyncadd [#allocation4], %s127
      %s130 = sshll.u32 [#allocation5], 4
      %s131 = int_to_ptr.vmem [resolvable:$true] %s130
      %133 = dma.vmem_to_hbm [thread:$0]  %s131, 128, %s3, [#allocation4]
    $region21: #{apply.1} parent=1 // pred_fallthru
      _
    // Predicated region
    $region22: #{apply.1} parent=1 // pred_check
      _
    $region23: #{apply.1} parent=1 // pred_check_branch
      %135 = sbr.rel (0) target = $region25
    $region24: #{apply.1} parent=1 // pred_region
      %136 = dma.done [#allocation4], 128
    $region25: #{apply.1} parent=1 // pred_fallthru
      _
    %137 = vsyncpa [#allocation3], 1
    %138 = vsyncpa [#allocation4], 1

</llo_original>
